<compile_context>
chip_gen: v6e
topology: v6e:2x2x1
jax: 0.10.0
libtpu: 0.0.40
codegen_flags: <defaults>
</compile_context>

<pallas_src>
import functools

import jax
import jax.numpy as jnp
from jax.experimental import pallas as pl
from jax.experimental.pallas import tpu as pltpu

# ConnectX board is 6 rows x 7 columns -> NUM_ACTIONS = BOARD_SIZE[1] = 7
BOARD_ROWS = 6
BOARD_COLS = 7
NUM_ACTIONS = BOARD_COLS
NUM_INPUT_UNITS = BOARD_ROWS * BOARD_COLS      # 42
NUM_HIDDEN_UNITS = 128
LEAKY_SLOPE = 0.01                              # torch LeakyReLU default
HEAD_W = NUM_ACTIONS + 1                        # fused head: 7 logits + 1 value = 8


def _round_up(x, m):
    return ((x + m - 1) // m) * m


def _actor_critic_kernel(nrows_ref, x_ref, w1_ref, b1_ref, wh_ref, bh_ref,
                         head_ref, pmax_ref, pidx_ref, *, tile_b):
    i = pl.program_id(0)
    nrows = nrows_ref[0]                                     # SMEM scalar: real batch size

    # ---- layer 1: x @ w1 + b1, LeakyReLU (f32 accumulation) ----
    h = jnp.dot(x_ref[...], w1_ref[...], preferred_element_type=jnp.float32)
    h = h + b1_ref[...]
    h = jnp.maximum(h, LEAKY_SLOPE * h)                      # LeakyReLU

    # ---- fused actor+critic head: (tile_b, 8) matmul, f32 accumulation ----
    head = jnp.dot(h.astype(wh_ref.dtype), wh_ref[...],
                   preferred_element_type=jnp.float32) + bh_ref[...]
    head_ref[...] = head                                     # narrow 8-lane store

    # ---- per-block argmax partials over the batch axis (first-max-index) ----
    row = jax.lax.broadcasted_iota(jnp.int32, head.shape, 0) + i * tile_b

    def emit(vals):
        blk_max = jnp.max(vals, axis=0, keepdims=True)                       # (1, 8)
        blk_idx = jnp.min(jnp.where(vals == blk_max, row, jnp.int32(2 ** 30)),
                          axis=0, keepdims=True)                             # (1, 8) i32
        pmax_ref[0] = blk_max
        pidx_ref[0] = blk_idx

    ragged = (i + 1) * tile_b > nrows                        # only last block can be ragged

    @pl.when(ragged)
    def _():
        emit(jnp.where(row < nrows, head, -jnp.inf))         # mask padded/garbage rows

    @pl.when(jnp.logical_not(ragged))
    def _():
        emit(head)


def pack_params(params, use_bf16=True):
    """One-time parameter packing: fuse actor+critic heads, pick MXU dtype."""
    w1, b1, wa, ba, wc, bc = params
    hid = w1.shape[1]
    a = wa.shape[1]
    cdt = jnp.bfloat16 if use_bf16 else jnp.float32

    w1p = w1.astype(cdt)                                          # (in_f, hid)
    b1p = b1.reshape(1, hid).astype(jnp.float32)                  # (1, hid), f32 add
    wh = jnp.concatenate([wa, wc], axis=1).astype(cdt)            # (hid, a+1)
    bh = jnp.concatenate([ba.reshape(1, a), bc.reshape(1, 1)],
                         axis=1).astype(jnp.float32)              # (1, a+1)
    return w1p, b1p, wh, bh


def actor_critic_forward(x, params, *, tile_b=1024, use_bf16=True):
    """x: (B, NUM_INPUT_UNITS). Returns (actor_logits, actor_actions, critic_value)."""
    w1p, b1p, wh, bh = pack_params(params, use_bf16)
    cdt = w1p.dtype
    B, in_f = x.shape
    hid = w1p.shape[1]
    head_w = wh.shape[1]

    # batch tile: big by default; single full-extent block when it covers B
    mult = 16 if use_bf16 else 8
    if _round_up(tile_b, mult) >= B:
        tb, grid = B, 1                       # block == full array (passes (8,128) rule)
    else:
        tb = _round_up(tile_b, mult)
        grid = (B + tb - 1) // tb             # ragged last block handled in-kernel

    xc = x.astype(cdt)                        # dtype cast only; no layout repack
    nrows = jnp.array([B], jnp.int32)         # SMEM scalar operand

    kernel = functools.partial(_actor_critic_kernel, tile_b=tb)

    head, pmax, pidx = pl.pallas_call(
        kernel,
        out_shape=(
            jax.ShapeDtypeStruct((B, head_w), jnp.float32),        # fused head
            jax.ShapeDtypeStruct((grid, 1, head_w), jnp.float32),  # per-block max
            jax.ShapeDtypeStruct((grid, 1, head_w), jnp.int32),    # per-block first idx
        ),
        grid=(grid,),
        in_specs=[
            pl.BlockSpec(memory_space=pltpu.MemorySpace.SMEM),     # nrows scalar
            pl.BlockSpec((tb, in_f), lambda i: (i, 0)),            # x (tiled over B)
            pl.BlockSpec((in_f, hid), lambda i: (0, 0)),           # w1
            pl.BlockSpec((1, hid), lambda i: (0, 0)),              # b1
            pl.BlockSpec((hid, head_w), lambda i: (0, 0)),         # fused head weight
            pl.BlockSpec((1, head_w), lambda i: (0, 0)),           # fused head bias
        ],
        out_specs=(
            pl.BlockSpec((tb, head_w), lambda i: (i, 0)),
            pl.BlockSpec((1, 1, head_w), lambda i: (i, 0, 0)),
            pl.BlockSpec((1, 1, head_w), lambda i: (i, 0, 0)),
        ),
        compiler_params=pltpu.CompilerParams(
            # no cross-block carry -> batch axis can shard across v7x's 2 TCs
            dimension_semantics=("parallel",),
            # budget against v7x's 64 MiB physical VMEM; tb=1024 uses ~2 MiB
            vmem_limit_bytes=32 * 1024 * 1024,
        ),
    )(nrows, xc, w1p, b1p, wh, bh)

    logits = head[:, :NUM_ACTIONS]
    value = head[:, NUM_ACTIONS:NUM_ACTIONS + 1]

    # tiny (grid, 7) final argmax reduce; jnp.argmax picks the earliest block
    # achieving the max, and per-block indices are already first-max -> exact
    # first-max-index semantics over dim=0.
    pm = pmax[:, 0, :NUM_ACTIONS]
    pi = pidx[:, 0, :NUM_ACTIONS]
    blk = jnp.argmax(pm, axis=0)
    actions = jnp.take_along_axis(pi, blk[None, :], axis=0)[0].astype(jnp.int32)
    return logits, actions, value


def init_params(key, num_input_units=NUM_INPUT_UNITS,
                num_hidden_units=NUM_HIDDEN_UNITS, num_actions=NUM_ACTIONS):
    """Deterministic init mimicking torch.nn.Linear default (U[-1/sqrt(fan_in), +])."""
    ks = jax.random.split(key, 6)

    def uni(k, shape, fan_in):
        bound = 1.0 / jnp.sqrt(jnp.float32(fan_in))
        return jax.random.uniform(k, shape, jnp.float32, -bound, bound)

    w1 = uni(ks[0], (num_input_units, num_hidden_units), num_input_units)
    b1 = uni(ks[1], (1, num_hidden_units), num_input_units)
    wa = uni(ks[2], (num_hidden_units, num_actions), num_hidden_units)
    ba = uni(ks[3], (1, num_actions), num_hidden_units)
    wc = uni(ks[4], (num_hidden_units, 1), num_hidden_units)
    bc = uni(ks[5], (1, 1), num_hidden_units)
    return (w1, b1, wa, ba, wc, bc)


def _reference_forward(x, params):
    """Pure-JAX reference mirroring the PyTorch module."""
    w1, b1, wa, ba, wc, bc = params
    h = x @ w1 + b1
    h = jnp.where(h >= 0.0, h, LEAKY_SLOPE * h)
    logits = h @ wa + ba
    actions = jnp.argmax(logits, axis=0).astype(jnp.int32)
    value = h @ wc + bc
    return logits, actions, value


def _check(logits, actions, value, ref, B, atol, rtol):
    rl, _, rv = ref
    assert logits.shape == (B, NUM_ACTIONS) and logits.dtype == jnp.float32
    assert actions.shape == (NUM_ACTIONS,) and actions.dtype == jnp.int32
    assert value.shape == (B, 1) and value.dtype == jnp.float32
    assert jnp.allclose(logits, rl, atol=atol, rtol=rtol)
    assert jnp.allclose(value, rv, atol=atol, rtol=rtol)
    # argmax is computed from the kernel's own f32 logits -> must match exactly
    # (incl. tie-breaking) an argmax over the returned logits.
    assert jnp.array_equal(actions, jnp.argmax(logits, axis=0).astype(jnp.int32))


if __name__ == "__main__":
    key = jax.random.PRNGKey(0)
    pkey, xkey1, xkey2 = jax.random.split(key, 3)
    params = init_params(pkey)

    # --- small batch, single full-extent block, f32 operands ---
    B = 8
    x = jax.random.normal(xkey1, (B, NUM_INPUT_UNITS), jnp.float32)
    out = actor_critic_forward(x, params, use_bf16=False)
    jax.block_until_ready(out)
    _check(*out, _reference_forward(x, params), B, atol=1e-2, rtol=1e-2)

    # --- ragged batch tiled over a 3-block grid (f32): exercises partial-block
    #     masking and the cross-block argmax reduce ---
    B2 = 20
    x2 = jax.random.normal(xkey2, (B2, NUM_INPUT_UNITS), jnp.float32)
    ref2 = _reference_forward(x2, params)
    out2 = actor_critic_forward(x2, params, tile_b=8, use_bf16=False)
    jax.block_until_ready(out2)
    _check(*out2, ref2, B2, atol=1e-2, rtol=1e-2)

    # --- bf16 operands (f32 accumulation), 2-block grid with ragged last block ---
    out3 = actor_critic_forward(x2, params, tile_b=16, use_bf16=True)
    jax.block_until_ready(out3)
    _check(*out3, ref2, B2, atol=5e-2, rtol=5e-2)

    # --- default configuration (bf16, tile_b=1024 -> single block) ---
    out4 = actor_critic_forward(x2, params)
    jax.block_until_ready(out4)
    _check(*out4, ref2, B2, atol=5e-2, rtol=5e-2)

    print("KERNEL_OK")
</pallas_src>

<mosaic_0001>
module attributes {stable_mosaic.version = 11 : i64} {
  func.func @_actor_critic_kernel(%arg0: i32, %arg1: memref<1xi32, #tpu.memory_space<smem>>, %arg2: memref<8x42xf32, #tpu.memory_space<vmem>>, %arg3: memref<42x128xf32, #tpu.memory_space<vmem>>, %arg4: memref<1x128xf32, #tpu.memory_space<vmem>>, %arg5: memref<128x8xf32, #tpu.memory_space<vmem>>, %arg6: memref<1x8xf32, #tpu.memory_space<vmem>>, %arg7: memref<8x8xf32, #tpu.memory_space<vmem>>, %arg8: memref<1x1x8xf32, #tpu.memory_space<vmem>>, %arg9: memref<1x1x8xi32, #tpu.memory_space<vmem>>) attributes {dimension_semantics = [#tpu.dimension_semantics<parallel>], iteration_bounds = array<i64: 1>, scalar_prefetch = 0 : i64, scratch_operands = 0 : i64, tpu.core_type = #tpu.core_type<tc>, window_params = [{transform_indices = @transform_0, window_bounds = array<i64: 1>}, {transform_indices = @transform_1, window_bounds = array<i64: 8, 42>}, {pipeline_mode = #tpu.pipeline_mode<synchronous>, transform_indices = @transform_2, window_bounds = array<i64: 42, 128>}, {pipeline_mode = #tpu.pipeline_mode<synchronous>, transform_indices = @transform_3, window_bounds = array<i64: 1, 128>}, {pipeline_mode = #tpu.pipeline_mode<synchronous>, transform_indices = @transform_4, window_bounds = array<i64: 128, 8>}, {pipeline_mode = #tpu.pipeline_mode<synchronous>, transform_indices = @transform_5, window_bounds = array<i64: 1, 8>}, {transform_indices = @transform_6, window_bounds = array<i64: 8, 8>}, {transform_indices = @transform_7, window_bounds = array<i64: 1, 1, 8>}, {transform_indices = @transform_8, window_bounds = array<i64: 1, 1, 8>}]} {
    %c0 = arith.constant 0 : index
    %0 = memref.load %arg1[%c0] : memref<1xi32, #tpu.memory_space<smem>>
    %c0_0 = arith.constant 0 : index
    %c0_1 = arith.constant 0 : index
    %1 = vector.load %arg2[%c0_0, %c0_1] : memref<8x42xf32, #tpu.memory_space<vmem>>, vector<8x42xf32>
    %c0_2 = arith.constant 0 : index
    %c0_3 = arith.constant 0 : index
    %2 = vector.load %arg3[%c0_2, %c0_3] : memref<42x128xf32, #tpu.memory_space<vmem>>, vector<42x128xf32>
    %cst = arith.constant dense<0.000000e+00> : vector<8x128xf32>
    %3 = tpu.matmul %1, %2, %cst {dimension_numbers = #tpu.dot_dimension_numbers<[1], [0], [0], [1], [0, 0, 1, 1], [], []>} : vector<8x42xf32>, vector<42x128xf32>, vector<8x128xf32> -> vector<8x128xf32>
    %c0_4 = arith.constant 0 : index
    %c0_5 = arith.constant 0 : index
    %4 = vector.load %arg4[%c0_4, %c0_5] : memref<1x128xf32, #tpu.memory_space<vmem>>, vector<1x128xf32>
    %5 = vector.broadcast %4 : vector<1x128xf32> to vector<8x128xf32>
    %6 = arith.addf %3, %5 : vector<8x128xf32>
    %cst_6 = arith.constant 0.00999999977 : f32
    %7 = vector.broadcast %cst_6 : f32 to vector<8x128xf32>
    %8 = arith.mulf %7, %6 : vector<8x128xf32>
    %9 = arith.maximumf %6, %8 : vector<8x128xf32>
    %c0_7 = arith.constant 0 : index
    %c0_8 = arith.constant 0 : index
    %10 = vector.load %arg5[%c0_7, %c0_8] : memref<128x8xf32, #tpu.memory_space<vmem>>, vector<128x8xf32>
    %cst_9 = arith.constant dense<0.000000e+00> : vector<8x8xf32>
    %11 = tpu.matmul %9, %10, %cst_9 {dimension_numbers = #tpu.dot_dimension_numbers<[1], [0], [0], [1], [0, 0, 1, 1], [], []>} : vector<8x128xf32>, vector<128x8xf32>, vector<8x8xf32> -> vector<8x8xf32>
    %c0_10 = arith.constant 0 : index
    %c0_11 = arith.constant 0 : index
    %12 = vector.load %arg6[%c0_10, %c0_11] : memref<1x8xf32, #tpu.memory_space<vmem>>, vector<1x8xf32>
    %13 = vector.broadcast %12 : vector<1x8xf32> to vector<8x8xf32>
    %14 = arith.addf %11, %13 : vector<8x8xf32>
    %c0_12 = arith.constant 0 : index
    %c0_13 = arith.constant 0 : index
    %15 = vector.load %arg7[%c0_12, %c0_13] : memref<8x8xf32, #tpu.memory_space<vmem>>, vector<8x8xf32>
    tpu.vector_store %arg7[%c0_12, %c0_13], %14 {strides = array<i32>} : memref<8x8xf32, #tpu.memory_space<vmem>>, vector<8x8xf32>,
    %16 = tpu.iota {dimensions = array<i32: 0>} : vector<8x8xi32>
    %c8_i32 = arith.constant 8 : i32
    %17 = arith.muli %arg0, %c8_i32 : i32
    %18 = vector.broadcast %17 : i32 to vector<8x8xi32>
    %19 = arith.addi %16, %18 : vector<8x8xi32>
    %c1_i32 = arith.constant 1 : i32
    %20 = arith.addi %arg0, %c1_i32 : i32
    %c8_i32_14 = arith.constant 8 : i32
    %21 = arith.muli %20, %c8_i32_14 : i32
    %22 = arith.cmpi sgt, %21, %0 : i32
    %23 = arith.extui %22 : i1 to i32
    %c0_i32 = arith.constant 0 : i32
    %24 = arith.cmpi ne, %23, %c0_i32 : i32
    scf.if %24 {
      %28 = vector.broadcast %0 : i32 to vector<8x8xi32>
      %29 = arith.cmpi slt, %19, %28 : vector<8x8xi32>
      %cst_16 = arith.constant 0xFF800000 : f32
      %30 = vector.broadcast %cst_16 : f32 to vector<8x8xf32>
      %31 = arith.select %29, %14, %30 : vector<8x8xi1>, vector<8x8xf32>
      %cst_17 = arith.constant dense<0xFF800000> : vector<8xf32>
      %32 = vector.multi_reduction <maximumf>, %31, %cst_17 [0] : vector<8x8xf32> to vector<8xf32>
      %33 = vector.shape_cast %32 : vector<8xf32> to vector<1x8xf32>
      %34 = vector.broadcast %33 : vector<1x8xf32> to vector<8x8xf32>
      %35 = arith.cmpf oeq, %31, %34 : vector<8x8xf32>
      %c1073741824_i32 = arith.constant 1073741824 : i32
      %36 = vector.broadcast %c1073741824_i32 : i32 to vector<8x8xi32>
      %37 = arith.select %35, %19, %36 : vector<8x8xi1>, vector<8x8xi32>
      %cst_18 = arith.constant dense<2147483647> : vector<8xi32>
      %38 = vector.multi_reduction <minsi>, %37, %cst_18 [0] : vector<8x8xi32> to vector<8xi32>
      %39 = vector.shape_cast %38 : vector<8xi32> to vector<1x8xi32>
      %c0_19 = arith.constant 0 : index
      %c0_20 = arith.constant 0 : index
      %c0_21 = arith.constant 0 : index
      %40 = vector.load %arg8[%c0_19, %c0_20, %c0_21] : memref<1x1x8xf32, #tpu.memory_space<vmem>>, vector<1x1x8xf32>
      %41 = vector.shape_cast %40 : vector<1x1x8xf32> to vector<1x8xf32>
      %42 = vector.shape_cast %33 : vector<1x8xf32> to vector<1x1x8xf32>
      tpu.vector_store %arg8[%c0_19, %c0_20, %c0_21], %42 {strides = array<i32>} : memref<1x1x8xf32, #tpu.memory_space<vmem>>, vector<1x1x8xf32>,
      %c0_22 = arith.constant 0 : index
      %c0_23 = arith.constant 0 : index
      %c0_24 = arith.constant 0 : index
      %43 = vector.load %arg9[%c0_22, %c0_23, %c0_24] : memref<1x1x8xi32, #tpu.memory_space<vmem>>, vector<1x1x8xi32>
      %44 = vector.shape_cast %43 : vector<1x1x8xi32> to vector<1x8xi32>
      %45 = vector.shape_cast %39 : vector<1x8xi32> to vector<1x1x8xi32>
      tpu.vector_store %arg9[%c0_22, %c0_23, %c0_24], %45 {strides = array<i32>} : memref<1x1x8xi32, #tpu.memory_space<vmem>>, vector<1x1x8xi32>,
    } else {
    }
    %true = arith.constant true
    %25 = arith.xori %22, %true : i1
    %26 = arith.extui %25 : i1 to i32
    %c0_i32_15 = arith.constant 0 : i32
    %27 = arith.cmpi ne, %26, %c0_i32_15 : i32
    scf.if %27 {
      %cst_16 = arith.constant dense<0xFF800000> : vector<8xf32>
      %28 = vector.multi_reduction <maximumf>, %14, %cst_16 [0] : vector<8x8xf32> to vector<8xf32>
      %29 = vector.shape_cast %28 : vector<8xf32> to vector<1x8xf32>
      %30 = vector.broadcast %29 : vector<1x8xf32> to vector<8x8xf32>
      %31 = arith.cmpf oeq, %14, %30 : vector<8x8xf32>
      %c1073741824_i32 = arith.constant 1073741824 : i32
      %32 = vector.broadcast %c1073741824_i32 : i32 to vector<8x8xi32>
      %33 = arith.select %31, %19, %32 : vector<8x8xi1>, vector<8x8xi32>
      %cst_17 = arith.constant dense<2147483647> : vector<8xi32>
      %34 = vector.multi_reduction <minsi>, %33, %cst_17 [0] : vector<8x8xi32> to vector<8xi32>
      %35 = vector.shape_cast %34 : vector<8xi32> to vector<1x8xi32>
      %c0_18 = arith.constant 0 : index
      %c0_19 = arith.constant 0 : index
      %c0_20 = arith.constant 0 : index
      %36 = vector.load %arg8[%c0_18, %c0_19, %c0_20] : memref<1x1x8xf32, #tpu.memory_space<vmem>>, vector<1x1x8xf32>
      %37 = vector.shape_cast %36 : vector<1x1x8xf32> to vector<1x8xf32>
      %38 = vector.shape_cast %29 : vector<1x8xf32> to vector<1x1x8xf32>
      tpu.vector_store %arg8[%c0_18, %c0_19, %c0_20], %38 {strides = array<i32>} : memref<1x1x8xf32, #tpu.memory_space<vmem>>, vector<1x1x8xf32>,
      %c0_21 = arith.constant 0 : index
      %c0_22 = arith.constant 0 : index
      %c0_23 = arith.constant 0 : index
      %39 = vector.load %arg9[%c0_21, %c0_22, %c0_23] : memref<1x1x8xi32, #tpu.memory_space<vmem>>, vector<1x1x8xi32>
      %40 = vector.shape_cast %39 : vector<1x1x8xi32> to vector<1x8xi32>
      %41 = vector.shape_cast %35 : vector<1x8xi32> to vector<1x1x8xi32>
      tpu.vector_store %arg9[%c0_21, %c0_22, %c0_23], %41 {strides = array<i32>} : memref<1x1x8xi32, #tpu.memory_space<vmem>>, vector<1x1x8xi32>,
    } else {
    }
    return
  }
  func.func @transform_0(%arg0: i32) -> i32 {
    %c0_i32 = arith.constant 0 : i32
    %c0_i32_0 = arith.constant 0 : i32
    return %c0_i32 : i32
  }
  func.func @transform_1(%arg0: i32) -> (i32, i32) {
    %c0_i32 = arith.constant 0 : i32
    %c0_i32_0 = arith.constant 0 : i32
    return %arg0, %c0_i32 : i32, i32
  }
  func.func @transform_2(%arg0: i32) -> (i32, i32) {
    %c0_i32 = arith.constant 0 : i32
    %c0_i32_0 = arith.constant 0 : i32
    %c0_i32_1 = arith.constant 0 : i32
    return %c0_i32, %c0_i32_0 : i32, i32
  }
  func.func @transform_3(%arg0: i32) -> (i32, i32) {
    %c0_i32 = arith.constant 0 : i32
    %c0_i32_0 = arith.constant 0 : i32
    %c0_i32_1 = arith.constant 0 : i32
    return %c0_i32, %c0_i32_0 : i32, i32
  }
  func.func @transform_4(%arg0: i32) -> (i32, i32) {
    %c0_i32 = arith.constant 0 : i32
    %c0_i32_0 = arith.constant 0 : i32
    %c0_i32_1 = arith.constant 0 : i32
    return %c0_i32, %c0_i32_0 : i32, i32
  }
  func.func @transform_5(%arg0: i32) -> (i32, i32) {
    %c0_i32 = arith.constant 0 : i32
    %c0_i32_0 = arith.constant 0 : i32
    %c0_i32_1 = arith.constant 0 : i32
    return %c0_i32, %c0_i32_0 : i32, i32
  }
  func.func @transform_6(%arg0: i32) -> (i32, i32) {
    %c0_i32 = arith.constant 0 : i32
    %c0_i32_0 = arith.constant 0 : i32
    return %arg0, %c0_i32 : i32, i32
  }
  func.func @transform_7(%arg0: i32) -> (i32, i32, i32) {
    %c0_i32 = arith.constant 0 : i32
    %c0_i32_0 = arith.constant 0 : i32
    %c0_i32_1 = arith.constant 0 : i32
    return %arg0, %c0_i32, %c0_i32_0 : i32, i32, i32
  }
  func.func @transform_8(%arg0: i32) -> (i32, i32, i32) {
    %c0_i32 = arith.constant 0 : i32
    %c0_i32_0 = arith.constant 0 : i32
    %c0_i32_1 = arith.constant 0 : i32
    return %arg0, %c0_i32, %c0_i32_0 : i32, i32, i32
  }
}

</mosaic_0001>

<llo_original>
// kernel: tpu_custom_call.1
$region0: #{tpu_custom_call.1}
  #allocation0 [shape = 'u32[]', space=smem, size = 0x4, offset = 0x4, fixed_abs, tag = 'smem constant byte address 0x4 - core index']
  #allocation1 [shape = 'u32[144,128]{1,0:T(1,128)}', space=vmem, size = 0x12000, scoped, tag = 'internal scratch']
  #allocation2 [shape = 's32[1]{0:T(128)S(6)}', space=smem, size = 0x200, scoped, tag = 'scoped memory for tpu_custom_call.1']
  %s0 = inlined_call_operand.<no memory space> [shape: s32[1], index: 0, kind: input, shape index: {}]
  %s1 = inlined_call_operand.vmem [shape: f32[8,42], index: 1, kind: input, shape index: {}]
  %s2 = inlined_call_operand.vmem [shape: f32[42,128], index: 2, kind: input, shape index: {}]
  %s3 = inlined_call_operand.vmem [shape: f32[1,128], index: 3, kind: input, shape index: {}]
  %s4 = inlined_call_operand.vmem [shape: f32[128,8], index: 4, kind: input, shape index: {}]
  %s5 = inlined_call_operand.vmem [shape: f32[1,8], index: 5, kind: input, shape index: {}]
  %s6 = inlined_call_operand.hbm [shape: f32[8,8], index: 6, kind: output, shape index: {0}]
  %s7 = inlined_call_operand.hbm [shape: f32[1,1,8], index: 7, kind: output, shape index: {1}]
  %s8 = inlined_call_operand.hbm [shape: s32[1,1,8], index: 8, kind: output, shape index: {2}]
  %9 = xla_tuple %s6, %s7, %s8
  %s10 = sld [smem:[#allocation0]]
  $region58: #{tpu_custom_call.1} parent=0
    _
  %s12 = ssub.s32 1, %s10
  %s13 = scalar_select 0, %s12, %s10
  %14 = sst [smem:[#allocation2]] %s0
  $region1: #{tpu_custom_call.1} parent=0
    #allocation3 [shape = 'u8[4096]{0}', space=vmem, size = 0x1000, scoped, tag = 'output window, operand 0, single buffered']
    #allocation4 [shape = 's32[1]{0}', space=sflag, size = 0x4, scoped, tag = 'scoped memory for tpu_custom_call.1']
    #allocation5 [shape = 'u8[512]{0}', space=vmem, size = 0x400, scoped, tag = 'output window, operand 1, single buffered']
    #allocation6 [shape = 's32[1]{0}', space=sflag, size = 0x4, scoped, tag = 'scoped memory for tpu_custom_call.1']
    #allocation7 [shape = 'u8[512]{0}', space=vmem, size = 0x400, scoped, tag = 'output window, operand 2, single buffered']
    %15 = vsyncpa [#allocation4], 0
    %16 = vsyncpa [#allocation6], 0
    // Predicated region
    $region2: #{tpu_custom_call.1} parent=1 // pred_check
      _
    $region3: #{tpu_custom_call.1} parent=1 // pred_check_branch
      %18 = sbr.rel (0) target = $region5
    $region4: #{tpu_custom_call.1} parent=1 // pred_region
      _
    $region5: #{tpu_custom_call.1} parent=1 // pred_fallthru
      _
    // Predicated region
    $region6: #{tpu_custom_call.1} parent=1 // pred_check
      _
    $region7: #{tpu_custom_call.1} parent=1 // pred_check_branch
      %20 = sbr.rel (0) target = $region9
    $region8: #{tpu_custom_call.1} parent=1 // pred_region
      _
    $region9: #{tpu_custom_call.1} parent=1 // pred_fallthru
      _
    // Predicated region
    $region10: #{tpu_custom_call.1} parent=1 // pred_check
      _
    $region11: #{tpu_custom_call.1} parent=1 // pred_check_branch
      %22 = sbr.rel (0) target = $region13
    $region12: #{tpu_custom_call.1} parent=1 // pred_region
      _
    $region13: #{tpu_custom_call.1} parent=1 // pred_fallthru
      _
    // Predicated region
    $region14: #{tpu_custom_call.1} parent=1 // pred_check
      _
    $region15: #{tpu_custom_call.1} parent=1 // pred_check_branch
      %24 = sbr.rel (0) target = $region17
    $region16: #{tpu_custom_call.1} parent=1 // pred_region
      _
    $region17: #{tpu_custom_call.1} parent=1 // pred_fallthru
      _
    // Predicated region
    $region18: #{tpu_custom_call.1} parent=1 // pred_check
      _
    $region19: #{tpu_custom_call.1} parent=1 // pred_check_branch
      %26 = sbr.rel (0) target = $region21
    $region20: #{tpu_custom_call.1} parent=1 // pred_region
      _
    $region21: #{tpu_custom_call.1} parent=1 // pred_fallthru
      _
    // Predicated region
    $region22: #{tpu_custom_call.1} parent=1 // pred_check
      _
    $region23: #{tpu_custom_call.1} parent=1 // pred_check_branch
      %28 = sbr.rel (0) target = $region25
    $region24: #{tpu_custom_call.1} parent=1 // pred_region
      _
    $region25: #{tpu_custom_call.1} parent=1 // pred_fallthru
      _
    %s29 = sld [smem:[#allocation2]]
    %v30 = vld [vmem:[%s1] sm:$0xff]
    %v31 = vld [vmem:[%s2] sm:$0xff]
    %v32 = vld [vmem:[%s2 + $0x8] sm:$0xff]
    %v33 = vld [vmem:[%s2 + $0x10] sm:$0xff]
    %v34 = vld [vmem:[%s2 + $0x18] sm:$0xff]
    %v35 = vld [vmem:[%s2 + $0x20] sm:$0xff]
    %v36 = vld [vmem:[%s2 + $0x28] sm:$0x3]
    %v37 = vld [vmem:[%s3] sm:$0x1]
    %v39 = vlaneseq
    %v40 = vshrl.u32 %v39, 7
    %v41 = vsub.s32 0, %v40
    %v42 = vrot.slane %v37, %v41
    %vm44 = vcmask 343040
    %v46 = vsel %vm44, %v30, 0
    %vm48 = vcmask 1041408
    %v50 = vsel %vm48, %v36, 0
    %52 = vmatprep.subr.mxu0 0.0
    %53 = vmatpush1.msra.mxu0 0.0
    %54 = vmatprep.subr.mxu0 0.0
    %55 = vmatpush1.msra.mxu0 0.0
    %56 = vmatprep.subr.mxu0 0.0
    %57 = vmatpush1.msra.mxu0 0.0
    %58 = vmatprep.subr.mxu0 0.0
    %59 = vmatpush1.msra.mxu0 0.0
    %60 = vmatprep.subr.mxu0 0.0
    %61 = vmatpush1.msra.mxu0 0.0
    %62 = vmatprep.subr.mxu0 0.0
    %63 = vmatpush1.msra.mxu0 0.0
    %64 = vmatprep.subr.mxu0 0.0
    %65 = vmatpush1.msra.mxu0 0.0
    %66 = vmatprep.subr.mxu0 0.0
    %67 = vmatpush1.msra.mxu0 0.0
    %68 = vmatprep.subr.mxu0 0.0
    %69 = vmatpush1.msra.mxu0 0.0
    %70 = vmatprep.subr.mxu0 0.0
    %71 = vmatpush1.msra.mxu0 0.0
    %72 = vmatprep.subr.mxu0 0.0
    %73 = vmatpush1.msra.mxu0 %v50
    %74 = vmatprep.subr.mxu0 0.0
    %75 = vmatpush1.msra.mxu0 %v35
    %76 = vmatprep.subr.mxu0 0.0
    %77 = vmatpush1.msra.mxu0 %v34
    %78 = vmatprep.subr.mxu0 0.0
    %79 = vmatpush1.msra.mxu0 %v33
    %80 = vmatprep.subr.mxu0 0.0
    %81 = vmatpush1.msra.mxu0 %v32
    %82 = vmatprep.subr.mxu0 0.0
    %83 = vmatpush1.msra.mxu0 %v31
    %84 = vmatprep.subr.mxu0 0.0
    %85 = vmatpush2.msra.mxu0 0.0
    %86 = vmatprep.subr.mxu0 0.0
    %87 = vmatpush2.msra.mxu0 0.0
    %88 = vmatprep.subr.mxu0 0.0
    %89 = vmatpush2.msra.mxu0 0.0
    %90 = vmatprep.subr.mxu0 0.0
    %91 = vmatpush2.msra.mxu0 0.0
    %92 = vmatprep.subr.mxu0 0.0
    %93 = vmatpush2.msra.mxu0 0.0
    %94 = vmatprep.subr.mxu0 0.0
    %95 = vmatpush2.msra.mxu0 0.0
    %96 = vmatprep.subr.mxu0 0.0
    %97 = vmatpush2.msra.mxu0 0.0
    %98 = vmatprep.subr.mxu0 0.0
    %99 = vmatpush2.msra.mxu0 0.0
    %100 = vmatprep.subr.mxu0 0.0
    %101 = vmatpush2.msra.mxu0 0.0
    %102 = vmatprep.subr.mxu0 0.0
    %103 = vmatpush2.msra.mxu0 0.0
    %104 = vmatprep.subr.mxu0 0.0
    %105 = vmatpush2.msra.mxu0 0.0
    %106 = vmatprep.subr.mxu0 0.0
    %107 = vmatpush2.msra.mxu0 0.0
    %108 = vmatprep.subr.mxu0 0.0
    %109 = vmatpush2.msra.mxu0 0.0
    %110 = vmatprep.subr.mxu0 0.0
    %111 = vmatpush2.msra.mxu0 0.0
    %112 = vmatprep.subr.mxu0 0.0
    %113 = vmatpush2.msra.mxu0 0.0
    %114 = vmatprep.subr.mxu0 0.0
    %115 = vmatpush2.msra.mxu0 0.0
    %116 = vmatprep.mubr.f32.mxu0 0.0
    %117 = vmatmul.mubr.f32.gmra.mxu0 %v46
    %v118 = vpop.f32.mrf.mxu0
    %v119 = vadd.f32 %v42, %v118
    %v120 = vpop.f32.mrf.mxu0
    %121 = vdwg.mxu0
    %v122 = vmul.f32 %v119, 0.01
    %v123 = vmax.f32 %v119, %v122
    %v124 = vld [vmem:[%s4] sm:$0xff]
    %v125 = vld [vmem:[%s4 + $0x8] sm:$0xff]
    %v126 = vld [vmem:[%s4 + $0x10] sm:$0xff]
    %v127 = vld [vmem:[%s4 + $0x18] sm:$0xff]
    %v128 = vld [vmem:[%s4 + $0x20] sm:$0xff]
    %v129 = vld [vmem:[%s4 + $0x28] sm:$0xff]
    %v130 = vld [vmem:[%s4 + $0x30] sm:$0xff]
    %v131 = vld [vmem:[%s4 + $0x38] sm:$0xff]
    %v132 = vld [vmem:[%s4 + $0x40] sm:$0xff]
    %v133 = vld [vmem:[%s4 + $0x48] sm:$0xff]
    %v134 = vld [vmem:[%s4 + $0x50] sm:$0xff]
    %v135 = vld [vmem:[%s4 + $0x58] sm:$0xff]
    %v136 = vld [vmem:[%s4 + $0x60] sm:$0xff]
    %v137 = vld [vmem:[%s4 + $0x68] sm:$0xff]
    %v138 = vld [vmem:[%s4 + $0x70] sm:$0xff]
    %v139 = vld [vmem:[%s4 + $0x78] sm:$0xff]
    %v140 = vld [vmem:[%s5] sm:$0x1]
    %v142 = vlaneseq
    %v143 = vshrl.u32 %v142, 7
    %v144 = vsub.s32 0, %v143
    %v145 = vrot.slane %v140, %v144
    %147 = vmatprep.subr.mxu0 0.0
    %148 = vmatpush1.msra.mxu0 %v139
    %149 = vmatprep.subr.mxu0 0.0
    %150 = vmatpush1.msra.mxu0 %v138
    %151 = vmatprep.subr.mxu0 0.0
    %152 = vmatpush1.msra.mxu0 %v137
    %153 = vmatprep.subr.mxu0 0.0
    %154 = vmatpush1.msra.mxu0 %v136
    %155 = vmatprep.subr.mxu0 0.0
    %156 = vmatpush1.msra.mxu0 %v135
    %157 = vmatprep.subr.mxu0 0.0
    %158 = vmatpush1.msra.mxu0 %v134
    %159 = vmatprep.subr.mxu0 0.0
    %160 = vmatpush1.msra.mxu0 %v133
    %161 = vmatprep.subr.mxu0 0.0
    %162 = vmatpush1.msra.mxu0 %v132
    %163 = vmatprep.subr.mxu0 0.0
    %164 = vmatpush1.msra.mxu0 %v131
    %165 = vmatprep.subr.mxu0 0.0
    %166 = vmatpush1.msra.mxu0 %v130
    %167 = vmatprep.subr.mxu0 0.0
    %168 = vmatpush1.msra.mxu0 %v129
    %169 = vmatprep.subr.mxu0 0.0
    %170 = vmatpush1.msra.mxu0 %v128
    %171 = vmatprep.subr.mxu0 0.0
    %172 = vmatpush1.msra.mxu0 %v127
    %173 = vmatprep.subr.mxu0 0.0
    %174 = vmatpush1.msra.mxu0 %v126
    %175 = vmatprep.subr.mxu0 0.0
    %176 = vmatpush1.msra.mxu0 %v125
    %177 = vmatprep.subr.mxu0 0.0
    %178 = vmatpush1.msra.mxu0 %v124
    %179 = vmatprep.subr.mxu0 0.0
    %180 = vmatpush2.msra.mxu0 0.0
    %181 = vmatprep.subr.mxu0 0.0
    %182 = vmatpush2.msra.mxu0 0.0
    %183 = vmatprep.subr.mxu0 0.0
    %184 = vmatpush2.msra.mxu0 0.0
    %185 = vmatprep.subr.mxu0 0.0
    %186 = vmatpush2.msra.mxu0 0.0
    %187 = vmatprep.subr.mxu0 0.0
    %188 = vmatpush2.msra.mxu0 0.0
    %189 = vmatprep.subr.mxu0 0.0
    %190 = vmatpush2.msra.mxu0 0.0
    %191 = vmatprep.subr.mxu0 0.0
    %192 = vmatpush2.msra.mxu0 0.0
    %193 = vmatprep.subr.mxu0 0.0
    %194 = vmatpush2.msra.mxu0 0.0
    %195 = vmatprep.subr.mxu0 0.0
    %196 = vmatpush2.msra.mxu0 0.0
    %197 = vmatprep.subr.mxu0 0.0
    %198 = vmatpush2.msra.mxu0 0.0
    %199 = vmatprep.subr.mxu0 0.0
    %200 = vmatpush2.msra.mxu0 0.0
    %201 = vmatprep.subr.mxu0 0.0
    %202 = vmatpush2.msra.mxu0 0.0
    %203 = vmatprep.subr.mxu0 0.0
    %204 = vmatpush2.msra.mxu0 0.0
    %205 = vmatprep.subr.mxu0 0.0
    %206 = vmatpush2.msra.mxu0 0.0
    %207 = vmatprep.subr.mxu0 0.0
    %208 = vmatpush2.msra.mxu0 0.0
    %209 = vmatprep.subr.mxu0 0.0
    %210 = vmatpush2.msra.mxu0 0.0
    %211 = vmatprep.mubr.f32.mxu0 0.0
    %212 = vmatmul.mubr.f32.gmra.mxu0 %v123
    %v213 = vpop.f32.mrf.mxu0
    %v214 = vadd.f32 %v145, %v213
    %v215 = vpop.f32.mrf.mxu0
    %216 = vdwg.mxu0
    %vm217 = vcmask 64512
    %218 = vst.msk [vmem:[#allocation3] sm:$0xff] %vm217, %v214
    %v219 = vlaneseq
    %v220 = vshrl.u32 %v219, 7
    %s221 = smul.u32 0, 8
    %v222 = vstv %s221
    %v223 = vadd.s32 %v220, %v222
    %s224 = sadd.s32 0, 1
    %s225 = smul.u32 %s224, 8
    %p226 = scmp.gt.s32.totalorder %s225, %s29
    // Predicated region
    $region26: #{tpu_custom_call.1} parent=1 // pred_check
      %p227 = pneg %p226
    $region27: #{tpu_custom_call.1} parent=1 // pred_check_branch
      %229 = sbr.rel (%p227) target = $region29
    $region28: #{tpu_custom_call.1} parent=1 // pred_region
      %v230 = vstv %s29
      %vm231 = vcmp.lt.s32.totalorder %v223, %v230
      %v232 = vsel %vm231, %v214, -inf
      %v233 = vsel %vm217, %v232, -inf
      %v234 = vrot.slane %v233, 4
      %v235 = vmax.f32 %v233, %v234
      %v236 = vrot.slane %v235, 2
      %v237 = vmax.f32 %v235, %v236
      %v238 = vrot.slane %v237, 1
      %v239 = vmax.f32 %v237, %v238
      %vm240 = vcmp.eq.f32.partialorder %v232, %v239
      %v241 = vsel %vm240, %v223, 1073741824
      %v242 = vsel %vm217, %v241, 2147483647
      %v243 = vrot.slane %v242, 4
      %vm244 = vcmp.lt.s32.totalorder %v242, %v243
      %v245 = vsel %vm244, %v242, %v243
      %v246 = vrot.slane %v245, 2
      %vm247 = vcmp.lt.s32.totalorder %v245, %v246
      %v248 = vsel %vm247, %v245, %v246
      %v249 = vrot.slane %v248, 1
      %vm250 = vcmp.lt.s32.totalorder %v248, %v249
      %v251 = vsel %vm250, %v248, %v249
      %vm252 = vcmask 57344
      %253 = vst.msk [vmem:[#allocation5] sm:$0x1] %vm252, %v239
      %254 = vst.msk [vmem:[#allocation7] sm:$0x1] %vm252, %v251
    $region29: #{tpu_custom_call.1} parent=1 // pred_fallthru
      _
    %p255 = scmp.le.s32.totalorder %s225, %s29
    // Predicated region
    $region30: #{tpu_custom_call.1} parent=1 // pred_check
      %p256 = pneg %p255
    $region31: #{tpu_custom_call.1} parent=1 // pred_check_branch
      %258 = sbr.rel (%p256) target = $region33
    $region32: #{tpu_custom_call.1} parent=1 // pred_region
      %v259 = vsel %vm217, %v214, -inf
      %v260 = vrot.slane %v259, 4
      %v261 = vmax.f32 %v259, %v260
      %v262 = vrot.slane %v261, 2
      %v263 = vmax.f32 %v261, %v262
      %v264 = vrot.slane %v263, 1
      %v265 = vmax.f32 %v263, %v264
      %vm266 = vcmp.eq.f32.partialorder %v214, %v265
      %v267 = vsel %vm266, %v223, 1073741824
      %v268 = vsel %vm217, %v267, 2147483647
      %v269 = vrot.slane %v268, 4
      %vm270 = vcmp.lt.s32.totalorder %v268, %v269
      %v271 = vsel %vm270, %v268, %v269
      %v272 = vrot.slane %v271, 2
      %vm273 = vcmp.lt.s32.totalorder %v271, %v272
      %v274 = vsel %vm273, %v271, %v272
      %v275 = vrot.slane %v274, 1
      %vm276 = vcmp.lt.s32.totalorder %v274, %v275
      %v277 = vsel %vm276, %v274, %v275
      %vm278 = vcmask 57344
      %279 = vst.msk [vmem:[#allocation5] sm:$0x1] %vm278, %v265
      %280 = vst.msk [vmem:[#allocation7] sm:$0x1] %vm278, %v277
    $region33: #{tpu_custom_call.1} parent=1 // pred_fallthru
      _
    // Predicated region
    $region34: #{tpu_custom_call.1} parent=1 // pred_check
      _
    $region35: #{tpu_custom_call.1} parent=1 // pred_check_branch
      %282 = sbr.rel (0) target = $region37
    $region36: #{tpu_custom_call.1} parent=1 // pred_region
      %s284 = ssub.s32 128, 128
      %285 = vsyncadd [#allocation4], %s284
      %s287 = sshll.u32 [#allocation3], 4
      %s288 = int_to_ptr.vmem [resolvable:$true] %s287
      %290 = dma.vmem_to_hbm [thread:$0]  %s288, 128, %s6, [#allocation4]
    $region37: #{tpu_custom_call.1} parent=1 // pred_fallthru
      _
    // Predicated region
    $region38: #{tpu_custom_call.1} parent=1 // pred_check
      _
    $region39: #{tpu_custom_call.1} parent=1 // pred_check_branch
      %292 = sbr.rel (0) target = $region41
    $region40: #{tpu_custom_call.1} parent=1 // pred_region
      %s294 = ssub.s32 16, 16
      %295 = vsyncadd [#allocation6], %s294
      %s297 = sshll.u32 [#allocation5], 4
      %s298 = int_to_ptr.vmem [resolvable:$true] %s297
      %300 = dma.vmem_to_hbm [thread:$0]  %s298, 16, %s7, [#allocation6]
    $region41: #{tpu_custom_call.1} parent=1 // pred_fallthru
      _
    // Predicated region
    $region42: #{tpu_custom_call.1} parent=1 // pred_check
      _
    $region43: #{tpu_custom_call.1} parent=1 // pred_check_branch
      %302 = sbr.rel (0) target = $region45
    $region44: #{tpu_custom_call.1} parent=1 // pred_region
      %s304 = ssub.s32 16, 16
      %305 = vsyncadd [#allocation6], %s304
      %s307 = sshll.u32 [#allocation7], 4
      %s308 = int_to_ptr.vmem [resolvable:$true] %s307
      %310 = dma.vmem_to_hbm [thread:$0]  %s308, 16, %s8, [#allocation6]
    $region45: #{tpu_custom_call.1} parent=1 // pred_fallthru
      _
    // Predicated region
    $region46: #{tpu_custom_call.1} parent=1 // pred_check
      _
    $region47: #{tpu_custom_call.1} parent=1 // pred_check_branch
      %312 = sbr.rel (0) target = $region49
    $region48: #{tpu_custom_call.1} parent=1 // pred_region
      %313 = dma.done [#allocation4], 128
    $region49: #{tpu_custom_call.1} parent=1 // pred_fallthru
      _
    // Predicated region
    $region50: #{tpu_custom_call.1} parent=1 // pred_check
      _
    $region51: #{tpu_custom_call.1} parent=1 // pred_check_branch
      %315 = sbr.rel (0) target = $region53
    $region52: #{tpu_custom_call.1} parent=1 // pred_region
      %316 = dma.done [#allocation6], 16
    $region53: #{tpu_custom_call.1} parent=1 // pred_fallthru
      _
    // Predicated region
    $region54: #{tpu_custom_call.1} parent=1 // pred_check
      _
    $region55: #{tpu_custom_call.1} parent=1 // pred_check_branch
      %318 = sbr.rel (0) target = $region57
    $region56: #{tpu_custom_call.1} parent=1 // pred_region
      %319 = dma.done [#allocation6], 16
    $region57: #{tpu_custom_call.1} parent=1 // pred_fallthru
      _
    %320 = vsyncpa [#allocation4], 1
    %321 = vsyncpa [#allocation6], 1

</llo_original>
